<compile_context>
chip_gen: v7x
topology: tpu7x:2x2x1
jax: 0.10.0
libtpu: 0.0.40
codegen_flags: <defaults>
</compile_context>

<pallas_src>
import functools

import jax
import jax.numpy as jnp
from jax import lax
from jax.experimental import pallas as pl
from jax.experimental.pallas import tpu as pltpu


def _round_up(n, m):
    return (n + m - 1) // m * m


def _embedding_kernel(seed_ref, ids_ref, tok_ref, *rest,
                      block_v, seq_len, d_embed, embedding_pos, training):
    """One grid step: (batch row b, vocab block k).

    seed_ref: SMEM (1,)          int32   dropout seed
    ids_ref : VMEM (T, 1)        int32   token ids of batch row b
    tok_ref : VMEM (block_v, D)  float32 vocab slab k of the embedding table
    pos_ref : VMEM (T, D)        float32 positional table (only if embedding_pos)
    out_ref : VMEM (T, D)        float32 output block for batch row b
    """
    if embedding_pos:
        pos_ref, out_ref = rest
    else:
        (out_ref,) = rest

    b = pl.program_id(0)
    k = pl.program_id(1)
    nk = pl.num_programs(1)

    # The output block is VMEM-resident across the vocab reduction axis
    # (its index_map ignores k) -> use it as the accumulator.
    @pl.when(k == 0)
    def _():
        out_ref[...] = jnp.zeros_like(out_ref)

    # MXU one-hot gather for this vocab slab: ids inside
    # [k*block_v, (k+1)*block_v) pick up their embedding row, others add 0.
    ids = ids_ref[...]                                              # (T, 1) int32
    vocab_ids = (lax.broadcasted_iota(jnp.int32, (seq_len, block_v), 1)
                 + k * block_v)                                     # (T, block_v)
    onehot = (ids == vocab_ids).astype(tok_ref.dtype)               # (T, block_v)
    out_ref[...] += jnp.dot(
        onehot, tok_ref[...],
        preferred_element_type=jnp.float32).astype(out_ref.dtype)

    # Final vocab slab: fuse positional add + dropout into a single block store.
    @pl.when(k == nk - 1)
    def _():
        val = out_ref[...].astype(jnp.float32)
        if embedding_pos:
            val = val + pos_ref[...].astype(jnp.float32)
        if training:
            # Dropout(p=0.5): keep w.p. 0.5, scale survivors by 1/(1-p) = 2.
            # Counter-based hash of (global row, channel, seed): deterministic,
            # never repeats across grid steps, no hardware PRNG needed.
            row = lax.broadcasted_iota(jnp.int32, (seq_len, d_embed), 0)
            col = lax.broadcasted_iota(jnp.int32, (seq_len, d_embed), 1)
            flat = ((b * seq_len + row) * d_embed + col).astype(jnp.uint32)
            seed = seed_ref[0].astype(jnp.uint32)
            x = flat * jnp.uint32(0x9E3779B1) + seed * jnp.uint32(0x85EBCA77)
            x = x ^ (x >> 16)
            x = x * jnp.uint32(0x7FEB352D)
            x = x ^ (x >> 15)
            x = x * jnp.uint32(0x846CA68B)
            x = x ^ (x >> 16)
            keep = (x & jnp.uint32(1)) == jnp.uint32(1)
            val = jnp.where(keep, val * 2.0, 0.0)
        out_ref[...] = val.astype(out_ref.dtype)


def embedding_block_forward(ids, tok_table, pos_table=None, *, seed=0,
                            embedding_pos=True, training=True, block_v=512):
    """Pallas implementation of EmbeddingBlock.forward.

    ids:       (B, T) int token ids
    tok_table: (n_token, d_embed) float32
    pos_table: (n_sequence, d_embed) float32 (required iff embedding_pos)
    returns:   (B, T, d_embed) float32
    """
    B, T = ids.shape
    V, D = tok_table.shape

    if embedding_pos:
        if pos_table is None or pos_table.shape[0] < T:
            raise ValueError("position table must have at least T rows")
        pos = pos_table[:T, :].astype(tok_table.dtype)

    # Vocab tiling: only a (block_v, D) slab of the table is VMEM-resident per step.
    block_v = max(8, min(block_v, _round_up(V, 8)))
    v_pad = _round_up(V, block_v)
    tok = tok_table if v_pad == V else jnp.pad(tok_table, ((0, v_pad - V), (0, 0)))
    n_vblocks = v_pad // block_v

    ids3 = ids.astype(jnp.int32).reshape(B, T, 1)
    seed_arr = jnp.asarray([seed], dtype=jnp.int32)

    kernel = functools.partial(
        _embedding_kernel, block_v=block_v, seq_len=T, d_embed=D,
        embedding_pos=embedding_pos, training=training)

    in_specs = [
        pl.BlockSpec(memory_space=pltpu.SMEM),                        # seed
        pl.BlockSpec((None, T, 1), lambda b, k: (b, 0, 0)),           # ids, per batch row
        pl.BlockSpec((block_v, D), lambda b, k: (k, 0)),              # vocab slab
    ]
    args = [seed_arr, ids3, tok]
    if embedding_pos:
        in_specs.append(pl.BlockSpec((T, D), lambda b, k: (0, 0)))    # pos table
        args.append(pos)

    cp_cls = getattr(pltpu, "CompilerParams", None)
    if cp_cls is None:  # older jax fallback
        cp_cls = getattr(pltpu, "TPUCompilerParams")
    compiler_params = cp_cls(dimension_semantics=("parallel", "arbitrary"))

    out = pl.pallas_call(
        kernel,
        out_shape=jax.ShapeDtypeStruct((B, T, D), tok_table.dtype),
        grid=(B, n_vblocks),
        in_specs=in_specs,
        out_specs=pl.BlockSpec((None, T, D), lambda b, k: (b, 0, 0)),
        compiler_params=compiler_params,
    )(*args)
    return out


if __name__ == "__main__":
    # Small deterministic config consistent with the module's forward.
    d_embed = 32
    n_token = 64
    n_sequence = 8
    B, T = 2, 8

    key = jax.random.PRNGKey(0)
    k_tok, k_pos, k_ids = jax.random.split(key, 3)
    tok_table = jax.random.normal(k_tok, (n_token, d_embed), dtype=jnp.float32)
    pos_table = jax.random.normal(k_pos, (n_sequence, d_embed), dtype=jnp.float32)
    ids = jax.random.randint(k_ids, (B, T), 0, n_token, dtype=jnp.int32)

    ref = tok_table[ids] + pos_table[jnp.arange(T)][None, :, :]

    # Eval mode (no dropout): gather + positional add must match the reference.
    out_eval = embedding_block_forward(ids, tok_table, pos_table, seed=0,
                                       embedding_pos=True, training=False)
    out_eval = jax.block_until_ready(out_eval)
    assert out_eval.shape == (B, T, d_embed)
    assert jnp.allclose(out_eval, ref, rtol=5e-2, atol=5e-2), "eval-mode mismatch"

    # embedding_pos=False branch (specialized kernel, no pos table DMA'd).
    out_nopos = embedding_block_forward(ids, tok_table, None, seed=0,
                                        embedding_pos=False, training=False)
    out_nopos = jax.block_until_ready(out_nopos)
    assert jnp.allclose(out_nopos, tok_table[ids], rtol=5e-2, atol=5e-2), "no-pos mismatch"

    # Training mode: dropout p=0.5 — survivors equal 2*(tok+pos), ~half dropped.
    out = embedding_block_forward(ids, tok_table, pos_table, seed=123,
                                  embedding_pos=True, training=True)
    out = jax.block_until_ready(out)
    assert out.shape == (B, T, d_embed)
    assert bool(jnp.all(jnp.isfinite(out)))
    kept = out != 0.0
    assert jnp.allclose(jnp.where(kept, out, 0.0),
                        jnp.where(kept, 2.0 * ref, 0.0), rtol=5e-2, atol=5e-2)
    drop_frac = 1.0 - float(jnp.mean(kept.astype(jnp.float32)))
    assert 0.2 < drop_frac < 0.8, f"unexpected drop fraction {drop_frac}"

    print("KERNEL_OK")
</pallas_src>

<mosaic_0001>
module attributes {stable_mosaic.version = 11 : i64} {
  func.func @_embedding_kernel(%arg0: i32, %arg1: i32, %arg2: memref<1xi32, #tpu.memory_space<smem>>, %arg3: memref<1x8x1xi32, #tpu.memory_space<vmem>>, %arg4: memref<64x32xf32, #tpu.memory_space<vmem>>, %arg5: memref<8x32xf32, #tpu.memory_space<vmem>>, %arg6: memref<1x8x32xf32, #tpu.memory_space<vmem>>) attributes {dimension_semantics = [#tpu.dimension_semantics<parallel>, #tpu.dimension_semantics<arbitrary>], iteration_bounds = array<i64: 2, 1>, scalar_prefetch = 0 : i64, scratch_operands = 0 : i64, tpu.core_type = #tpu.core_type<tc>, window_params = [{transform_indices = @transform_0, window_bounds = array<i64: 1>}, {transform_indices = @transform_1, window_bounds = array<i64: 1, 8, 1>}, {transform_indices = @transform_2, window_bounds = array<i64: 64, 32>}, {pipeline_mode = #tpu.pipeline_mode<synchronous>, transform_indices = @transform_3, window_bounds = array<i64: 8, 32>}, {transform_indices = @transform_4, window_bounds = array<i64: 1, 8, 32>}]} {
    %c0_i32 = arith.constant 0 : i32
    %0 = arith.cmpi eq, %arg1, %c0_i32 : i32
    %1 = arith.extui %0 : i1 to i32
    %c0_i32_0 = arith.constant 0 : i32
    %2 = arith.cmpi ne, %1, %c0_i32_0 : i32
    scf.if %2 {
      %cst_13 = arith.constant 0.000000e+00 : f32
      %24 = vector.broadcast %cst_13 : f32 to vector<8x32xf32>
      %c0_14 = arith.constant 0 : index
      %c0_15 = arith.constant 0 : index
      %c0_16 = arith.constant 0 : index
      %25 = vector.load %arg6[%c0_14, %c0_15, %c0_16] : memref<1x8x32xf32, #tpu.memory_space<vmem>>, vector<1x8x32xf32>
      %26 = vector.shape_cast %25 : vector<1x8x32xf32> to vector<8x32xf32>
      %27 = vector.shape_cast %24 : vector<8x32xf32> to vector<1x8x32xf32>
      tpu.vector_store %arg6[%c0_14, %c0_15, %c0_16], %27 {strides = array<i32>} : memref<1x8x32xf32, #tpu.memory_space<vmem>>, vector<1x8x32xf32>,
    } else {
    }
    %c0 = arith.constant 0 : index
    %c0_1 = arith.constant 0 : index
    %c0_2 = arith.constant 0 : index
    %3 = vector.load %arg3[%c0, %c0_1, %c0_2] : memref<1x8x1xi32, #tpu.memory_space<vmem>>, vector<1x8x1xi32>
    %4 = vector.shape_cast %3 : vector<1x8x1xi32> to vector<8x1xi32>
    %5 = tpu.iota {dimensions = array<i32: 1>} : vector<8x64xi32>
    %c64_i32 = arith.constant 64 : i32
    %6 = arith.muli %arg1, %c64_i32 : i32
    %7 = vector.broadcast %6 : i32 to vector<8x64xi32>
    %8 = arith.addi %5, %7 : vector<8x64xi32>
    %9 = vector.broadcast %4 : vector<8x1xi32> to vector<8x64xi32>
    %10 = arith.cmpi eq, %9, %8 : vector<8x64xi32>
    %11 = arith.extui %10 : vector<8x64xi1> to vector<8x64xi32>
    %12 = arith.sitofp %11 : vector<8x64xi32> to vector<8x64xf32>
    %c0_3 = arith.constant 0 : index
    %c0_4 = arith.constant 0 : index
    %c0_5 = arith.constant 0 : index
    %13 = vector.load %arg6[%c0_3, %c0_4, %c0_5] : memref<1x8x32xf32, #tpu.memory_space<vmem>>, vector<1x8x32xf32>
    %14 = vector.shape_cast %13 : vector<1x8x32xf32> to vector<8x32xf32>
    %c0_6 = arith.constant 0 : index
    %c0_7 = arith.constant 0 : index
    %15 = vector.load %arg4[%c0_6, %c0_7] : memref<64x32xf32, #tpu.memory_space<vmem>>, vector<64x32xf32>
    %cst = arith.constant dense<0.000000e+00> : vector<8x32xf32>
    %16 = tpu.matmul %12, %15, %cst {dimension_numbers = #tpu.dot_dimension_numbers<[1], [0], [0], [1], [0, 0, 1, 1], [], []>} : vector<8x64xf32>, vector<64x32xf32>, vector<8x32xf32> -> vector<8x32xf32>
    %17 = arith.addf %14, %16 : vector<8x32xf32>
    %c0_8 = arith.constant 0 : index
    %c0_9 = arith.constant 0 : index
    %c0_10 = arith.constant 0 : index
    %18 = vector.load %arg6[%c0_8, %c0_9, %c0_10] : memref<1x8x32xf32, #tpu.memory_space<vmem>>, vector<1x8x32xf32>
    %19 = vector.shape_cast %18 : vector<1x8x32xf32> to vector<8x32xf32>
    %20 = vector.shape_cast %17 : vector<8x32xf32> to vector<1x8x32xf32>
    tpu.vector_store %arg6[%c0_8, %c0_9, %c0_10], %20 {strides = array<i32>} : memref<1x8x32xf32, #tpu.memory_space<vmem>>, vector<1x8x32xf32>,
    %c0_i32_11 = arith.constant 0 : i32
    %21 = arith.cmpi eq, %arg1, %c0_i32_11 : i32
    %22 = arith.extui %21 : i1 to i32
    %c0_i32_12 = arith.constant 0 : i32
    %23 = arith.cmpi ne, %22, %c0_i32_12 : i32
    scf.if %23 {
      %c0_13 = arith.constant 0 : index
      %c0_14 = arith.constant 0 : index
      %c0_15 = arith.constant 0 : index
      %24 = vector.load %arg6[%c0_13, %c0_14, %c0_15] : memref<1x8x32xf32, #tpu.memory_space<vmem>>, vector<1x8x32xf32>
      %25 = vector.shape_cast %24 : vector<1x8x32xf32> to vector<8x32xf32>
      %c0_16 = arith.constant 0 : index
      %c0_17 = arith.constant 0 : index
      %26 = vector.load %arg5[%c0_16, %c0_17] : memref<8x32xf32, #tpu.memory_space<vmem>>, vector<8x32xf32>
      %27 = arith.addf %25, %26 : vector<8x32xf32>
      %c0_18 = arith.constant 0 : index
      %c0_19 = arith.constant 0 : index
      %c0_20 = arith.constant 0 : index
      %28 = vector.load %arg6[%c0_18, %c0_19, %c0_20] : memref<1x8x32xf32, #tpu.memory_space<vmem>>, vector<1x8x32xf32>
      %29 = vector.shape_cast %28 : vector<1x8x32xf32> to vector<8x32xf32>
      %30 = vector.shape_cast %27 : vector<8x32xf32> to vector<1x8x32xf32>
      tpu.vector_store %arg6[%c0_18, %c0_19, %c0_20], %30 {strides = array<i32>} : memref<1x8x32xf32, #tpu.memory_space<vmem>>, vector<1x8x32xf32>,
    } else {
    }
    return
  }
  func.func @transform_0(%arg0: i32, %arg1: i32) -> i32 {
    %c0_i32 = arith.constant 0 : i32
    %c0_i32_0 = arith.constant 0 : i32
    return %c0_i32 : i32
  }
  func.func @transform_1(%arg0: i32, %arg1: i32) -> (i32, i32, i32) {
    %c0_i32 = arith.constant 0 : i32
    %c0_i32_0 = arith.constant 0 : i32
    %c0_i32_1 = arith.constant 0 : i32
    return %arg0, %c0_i32, %c0_i32_0 : i32, i32, i32
  }
  func.func @transform_2(%arg0: i32, %arg1: i32) -> (i32, i32) {
    %c0_i32 = arith.constant 0 : i32
    %c0_i32_0 = arith.constant 0 : i32
    return %arg1, %c0_i32 : i32, i32
  }
  func.func @transform_3(%arg0: i32, %arg1: i32) -> (i32, i32) {
    %c0_i32 = arith.constant 0 : i32
    %c0_i32_0 = arith.constant 0 : i32
    %c0_i32_1 = arith.constant 0 : i32
    return %c0_i32, %c0_i32_0 : i32, i32
  }
  func.func @transform_4(%arg0: i32, %arg1: i32) -> (i32, i32, i32) {
    %c0_i32 = arith.constant 0 : i32
    %c0_i32_0 = arith.constant 0 : i32
    %c0_i32_1 = arith.constant 0 : i32
    return %arg0, %c0_i32, %c0_i32_0 : i32, i32, i32
  }
}

</mosaic_0001>

<llo_original>
// kernel: tpu_custom_call.1
$region0: #{tpu_custom_call.1}
  #allocation0 [shape = 'u32[]', space=smem, size = 0x4, offset = 0x4, fixed_abs, tag = 'smem constant byte address 0x4 - core index']
  #allocation1 [shape = 'u32[144,128]{1,0:T(1,128)}', space=vmem, size = 0x12000, scoped, tag = 'internal scratch']
  #allocation2 [shape = 's32[1]{0:T(128)S(6)}', space=smem, size = 0x200, scoped, tag = 'scoped memory for tpu_custom_call.1']
  %s0 = inlined_call_operand.<no memory space> [shape: s32[1], index: 0, kind: input, shape index: {}]
  %s1 = inlined_call_operand.vmem [shape: s32[2,8,1], index: 1, kind: input, shape index: {}]
  %s2 = inlined_call_operand.vmem [shape: f32[64,32], index: 2, kind: input, shape index: {}]
  %s3 = inlined_call_operand.vmem [shape: f32[8,32], index: 3, kind: input, shape index: {}]
  %s4 = inlined_call_operand.hbm [shape: f32[2,8,32], index: 4, kind: output, shape index: {}]
  %s5 = sld [smem:[#allocation0]]
  $region57: #{tpu_custom_call.1} parent=0
    _
  %s7 = ssub.s32 1, %s5
  %s8 = scalar_select 0, %s7, %s5
  %9 = sst [smem:[#allocation2]] %s0
  $region1: #{tpu_custom_call.1} parent=0
    #allocation3 [shape = 'u8[8192]{0}', space=vmem, size = 0x2000, scoped, tag = 'output window, operand 0']
    #allocation4 [shape = 's32[2]{0}', space=sflag, size = 0x8, scoped, tag = 'scoped memory for tpu_custom_call.1']
    %10 = vsyncpa [#allocation4], 0
    %s11 = scalar_lea.sflag [#allocation4], 1
    %12 = vsyncpa %s11, 0
    loop: start=0, step=1, limit=4
    $region2: #{tpu_custom_call.1} parent=1 // loop_pre_header
      _
    $region3: #{tpu_custom_call.1} parent=1 // loop_header
      %s14 = sphi 0, %s18
      %p15 = scmp.ge.s32.totalorder %s14, 4
      %s21 = sphi 0, %s33
      %s22 = sphi 0, %s29
      %s23 = sphi 0, %s21
      %s24 = sphi 0, %s22
      %s25 = sphi 0, %s23
      %s26 = sphi 0, %s24
      %s34 = sphi 0, %s34
      %s36 = sphi 0, %s34
      %s37 = sphi 0, %s36
      %s51 = sphi 0, %s37
      %s57 = sphi 0, %s59
      %s60 = sphi 0, %s57
      %s61 = sphi 0, %s60
      %s77 = sphi 0, %s61
      %s83 = sphi 0, %s85
      %s86 = sphi 0, %s83
      %s87 = sphi 0, %s86
      %s103 = sphi 0, %s87
      %s107 = sphi 0, %s107
      %s109 = sphi 0, %s107
      %s110 = sphi 0, %s109
      %s124 = sphi 0, %s110
      %s130 = sphi 0, %s132
      %s133 = sphi 0, %s130
      %s134 = sphi 0, %s133
      %s150 = sphi 0, %s134
    $region4: #{tpu_custom_call.1} parent=1 // loop_header_branch
      %17 = sbr.rel (%p15) target = $region8
    $region5: #{tpu_custom_call.1} parent=1 // loop_body
      %s19 = ssub.s32 %s14, 1
      %s20 = ssub.s32 %s14, 2
      %s27 = sadd.s32 1, %s22
      %p28 = scmp.ge.s32.totalorder %s27, 1
      %s29 = scalar_select %p28, 0, %s27
      %s30 = sadd.s32 1, %s21
      %s31 = scalar_select %p28, %s30, %s21
      %p32 = scmp.ge.s32.totalorder %s31, 2
      %s33 = scalar_select %p32, 0, %s31
      %s35 = sadd.s32 %s34, 1
      %p38 = scmp.eq.s32.totalorder %s14, 1
      %p39 = scmp.ne.s32.totalorder %s34, %s36
      %p40 = scmp.eq.s32.totalorder %s14, 0
      %p41 = por %p39, %p40
      %p42 = scmp.ne.s32.totalorder %s34, %s36
      %p43 = scmp.eq.s32.totalorder %s19, 1
      %p44 = por %p42, %p43
      %p45 = scmp.ne.s32.totalorder %s36, %s37
      %p46 = scmp.eq.s32.totalorder %s19, 0
      %p47 = por %p45, %p46
      %p48 = scmp.ne.s32.totalorder %s36, %s37
      %p49 = scmp.eq.s32.totalorder %s20, 1
      %p50 = por %p48, %p49
      %p52 = scmp.ne.s32.totalorder %s37, %s51
      %p53 = scmp.eq.s32.totalorder %s20, 0
      %p54 = por %p52, %p53
      %s55 = ssub.s32 %s21, %s33
      %p56 = scmp.eq.s32.totalorder %s55, 0
      %s58 = sadd.s32 %s57, 1
      %s59 = scalar_select %p56, %s57, %s58
      %p62 = pneg %p56
      %p63 = scmp.eq.s32.totalorder %s14, 1
      %p64 = por %p62, %p63
      %p65 = scmp.ne.s32.totalorder %s57, %s60
      %p66 = scmp.eq.s32.totalorder %s14, 0
      %p67 = por %p65, %p66
      %p68 = scmp.ne.s32.totalorder %s57, %s60
      %p69 = scmp.eq.s32.totalorder %s19, 1
      %p70 = por %p68, %p69
      %p71 = scmp.ne.s32.totalorder %s60, %s61
      %p72 = scmp.eq.s32.totalorder %s19, 0
      %p73 = por %p71, %p72
      %p74 = scmp.ne.s32.totalorder %s60, %s61
      %p75 = scmp.eq.s32.totalorder %s20, 1
      %p76 = por %p74, %p75
      %p78 = scmp.ne.s32.totalorder %s61, %s77
      %p79 = scmp.eq.s32.totalorder %s20, 0
      %p80 = por %p78, %p79
      %s81 = ssub.s32 %s22, %s29
      %p82 = scmp.eq.s32.totalorder %s81, 0
      %s84 = sadd.s32 %s83, 1
      %s85 = scalar_select %p82, %s83, %s84
      %p88 = pneg %p82
      %p89 = scmp.eq.s32.totalorder %s14, 1
      %p90 = por %p88, %p89
      %p91 = scmp.ne.s32.totalorder %s83, %s86
      %p92 = scmp.eq.s32.totalorder %s14, 0
      %p93 = por %p91, %p92
      %p94 = scmp.ne.s32.totalorder %s83, %s86
      %p95 = scmp.eq.s32.totalorder %s19, 1
      %p96 = por %p94, %p95
      %p97 = scmp.ne.s32.totalorder %s86, %s87
      %p98 = scmp.eq.s32.totalorder %s19, 0
      %p99 = por %p97, %p98
      %p100 = scmp.ne.s32.totalorder %s86, %s87
      %p101 = scmp.eq.s32.totalorder %s20, 1
      %p102 = por %p100, %p101
      %p104 = scmp.ne.s32.totalorder %s87, %s103
      %p105 = scmp.eq.s32.totalorder %s20, 0
      %p106 = por %p104, %p105
      %s108 = sadd.s32 %s107, 1
      %p111 = scmp.eq.s32.totalorder %s14, 1
      %p112 = scmp.ne.s32.totalorder %s107, %s109
      %p113 = scmp.eq.s32.totalorder %s14, 0
      %p114 = por %p112, %p113
      %p115 = scmp.ne.s32.totalorder %s107, %s109
      %p116 = scmp.eq.s32.totalorder %s19, 1
      %p117 = por %p115, %p116
      %p118 = scmp.ne.s32.totalorder %s109, %s110
      %p119 = scmp.eq.s32.totalorder %s19, 0
      %p120 = por %p118, %p119
      %p121 = scmp.ne.s32.totalorder %s109, %s110
      %p122 = scmp.eq.s32.totalorder %s20, 1
      %p123 = por %p121, %p122
      %p125 = scmp.ne.s32.totalorder %s110, %s124
      %p126 = scmp.eq.s32.totalorder %s20, 0
      %p127 = por %p125, %p126
      %s128 = ssub.s32 %s21, %s33
      %p129 = scmp.eq.s32.totalorder %s128, 0
      %s131 = sadd.s32 %s130, 1
      %s132 = scalar_select %p129, %s130, %s131
      %p135 = pneg %p129
      %p136 = scmp.eq.s32.totalorder %s14, 1
      %p137 = por %p135, %p136
      %p138 = scmp.ne.s32.totalorder %s130, %s133
      %p139 = scmp.eq.s32.totalorder %s14, 0
      %p140 = por %p138, %p139
      %p141 = scmp.ne.s32.totalorder %s130, %s133
      %p142 = scmp.eq.s32.totalorder %s19, 1
      %p143 = por %p141, %p142
      %p144 = scmp.ne.s32.totalorder %s133, %s134
      %p145 = scmp.eq.s32.totalorder %s19, 0
      %p146 = por %p144, %p145
      %p147 = scmp.ne.s32.totalorder %s133, %s134
      %p148 = scmp.eq.s32.totalorder %s20, 1
      %p149 = por %p147, %p148
      %p151 = scmp.ne.s32.totalorder %s134, %s150
      %p152 = scmp.eq.s32.totalorder %s20, 0
      %p153 = por %p151, %p152
      %p154 = scmp.le.s32.totalorder 1, %s14
      %p155 = scmp.lt.s32.totalorder %s14, 3
      %p156 = pnand %p154, %p155
      %p157 = pneg %p156
      // Predicated region
      $region9: #{tpu_custom_call.1} parent=5 // pred_check
        _
      $region10: #{tpu_custom_call.1} parent=5 // pred_check_branch
        %159 = sbr.rel (%p156) target = $region12
      $region11: #{tpu_custom_call.1} parent=5 // pred_region
        %s160 = ssub.s32 %s14, 1
        // Predicated region
        $region13: #{tpu_custom_call.1} parent=11 // pred_check
          %p161 = pneg %p47
        $region14: #{tpu_custom_call.1} parent=11 // pred_check_branch
          %163 = sbr.rel (%p161) target = $region16
        $region15: #{tpu_custom_call.1} parent=11 // pred_region
          _
        $region16: #{tpu_custom_call.1} parent=11 // pred_fallthru
          _
        // Predicated region
        $region17: #{tpu_custom_call.1} parent=11 // pred_check
          %p164 = pneg %p99
        $region18: #{tpu_custom_call.1} parent=11 // pred_check_branch
          %166 = sbr.rel (%p164) target = $region20
        $region19: #{tpu_custom_call.1} parent=11 // pred_region
          %s167 = smul.u32 8, %s24
          %p168 = scmp.lt.s32.totalorder %s167, 7
          %s169 = scalar_select %p168, %s167, 7
          %s170 = smul.addr %s169, 8
          %s171 = scalar_lea.vmem %s2, %s170
          %s172 = smul.u32 8, %s24
        $region20: #{tpu_custom_call.1} parent=11 // pred_fallthru
          _
        // Predicated region
        $region21: #{tpu_custom_call.1} parent=11 // pred_check
          %p173 = pneg %p120
        $region22: #{tpu_custom_call.1} parent=11 // pred_check_branch
          %175 = sbr.rel (%p173) target = $region24
        $region23: #{tpu_custom_call.1} parent=11 // pred_region
          _
        $region24: #{tpu_custom_call.1} parent=11 // pred_fallthru
          _
      $region12: #{tpu_custom_call.1} parent=5 // pred_fallthru
        _
      %p176 = scmp.lt.s32.totalorder %s14, 2
      // Predicated region
      $region25: #{tpu_custom_call.1} parent=5 // pred_check
        %p177 = pneg %p176
      $region26: #{tpu_custom_call.1} parent=5 // pred_check_branch
        %179 = sbr.rel (%p177) target = $region28
      $region27: #{tpu_custom_call.1} parent=5 // pred_region
        // Predicated region
        $region29: #{tpu_custom_call.1} parent=27 // pred_check
          %p180 = pneg %p67
        $region30: #{tpu_custom_call.1} parent=27 // pred_check_branch
          %182 = sbr.rel (%p180) target = $region32
        $region31: #{tpu_custom_call.1} parent=27 // pred_region
          %p183 = scmp.lt.s32.totalorder %s21, 1
          %s184 = scalar_select %p183, %s21, 1
          %s185 = smul.addr %s184, 8
          %s186 = scalar_lea.vmem %s1, %s185
        $region32: #{tpu_custom_call.1} parent=27 // pred_fallthru
          _
      $region28: #{tpu_custom_call.1} parent=5 // pred_fallthru
        _
      %p187 = scmp.le.s32.totalorder 1, %s14
      %p188 = scmp.lt.s32.totalorder %s14, 3
      %p189 = pnand %p187, %p188
      %p190 = pneg %p189
      // Predicated region
      $region33: #{tpu_custom_call.1} parent=5 // pred_check
        _
      $region34: #{tpu_custom_call.1} parent=5 // pred_check_branch
        %192 = sbr.rel (%p189) target = $region36
      $region35: #{tpu_custom_call.1} parent=5 // pred_region
        %s193 = ssub.s32 %s14, 1
        %p194 = pneg %p47
        %p195 = pneg %p44
        %p196 = scmp.lt.s32.totalorder %s23, 1
        %s197 = scalar_select %p196, %s23, 1
        %s198 = smul.addr %s197, 8
        %s199 = scalar_lea.vmem %s1, %s198
        %p200 = pneg %p73
        %p201 = pneg %p70
        %s202 = smul.u32 8, %s24
        %p203 = scmp.lt.s32.totalorder %s202, 7
        %s204 = scalar_select %p203, %s202, 7
        %s205 = smul.addr %s204, 8
        %s206 = scalar_lea.vmem %s2, %s205
        %p207 = pneg %p99
        %p208 = pneg %p96
        %p209 = pneg %p120
        %p210 = pneg %p117
        %p211 = pneg %p146
        %p212 = pneg %p143
        %s213 = sand.u32 %s133, 1
        %s214 = scalar_lea.sflag [#allocation4], %s213
        %s215 = sand.u32 %s133, 1
        %s216 = smul.addr %s215, 8
        %s217 = scalar_lea.vmem [#allocation3], %s216
        %p218 = scmp.lt.s32.totalorder %s23, 1
        %s219 = scalar_select %p218, %s23, 1
        %s220 = smul.addr %s219, 8
        %s221 = scalar_lea.vmem %s1, %s220
        %s222 = smul.u32 8, %s24
        %p223 = scmp.lt.s32.totalorder %s222, 7
        %s224 = scalar_select %p223, %s222, 7
        %s225 = smul.addr %s224, 8
        %s226 = scalar_lea.vmem %s2, %s225
        %s227 = smul.u32 8, %s24
        %p228 = scmp.eq.s32.totalorder %s24, 0
        // Predicated region
        $region37: #{tpu_custom_call.1} parent=35 // pred_check
          %p229 = pneg %p228
        $region38: #{tpu_custom_call.1} parent=35 // pred_check_branch
          %231 = sbr.rel (%p229) target = $region40
        $region39: #{tpu_custom_call.1} parent=35 // pred_region
          %vm232 = vcmask 261120
          %233 = vst.msk [vmem:[%s217] sm:$0xff] %vm232, 0.0
        $region40: #{tpu_custom_call.1} parent=35 // pred_fallthru
          _
        %v234 = vld [vmem:[%s221] sm:$0xff]
        %v235 = vlaneseq
        %v236 = vand.u32 %v235, 127
        %s237 = smul.u32 %s24, 64
        %v238 = vstv %s237
        %v239 = vadd.s32 %v236, %v238
        %240 = vset.pattern.permute.xlu0 0
        %241 = vperm.xlu0 %240, %v234
        %v242 = vpop.permute.xlu0 %241
        %vm243 = vcmp.eq.s32.totalorder %v242, %v239
        %v244 = vsel %vm243, 1, 0
        %v245 = vcvt.s32.f32 %v244
        %v246 = vld [vmem:[%s217] sm:$0xff]
        %v247 = vld [vmem:[%s226] sm:$0xff]
        %v248 = vld [vmem:[%s226 + $0x8] sm:$0xff]
        %v249 = vld [vmem:[%s226 + $0x10] sm:$0xff]
        %v250 = vld [vmem:[%s226 + $0x18] sm:$0xff]
        %v251 = vld [vmem:[%s226 + $0x20] sm:$0xff]
        %v252 = vld [vmem:[%s226 + $0x28] sm:$0xff]
        %v253 = vld [vmem:[%s226 + $0x30] sm:$0xff]
        %v254 = vld [vmem:[%s226 + $0x38] sm:$0xff]
        %vm255 = vcmask 523264
        %v257 = vsel %vm255, %v245, 0
        %259 = vmatprep.subr.mxu0 0.0
        %260 = vmatpush1.msra.mxu0 %v247
        %261 = vmatprep.subr.mxu0 0.0
        %262 = vmatpush1.msra.mxu0 %v248
        %263 = vmatprep.subr.mxu0 0.0
        %264 = vmatpush1.msra.mxu0 %v249
        %265 = vmatprep.subr.mxu0 0.0
        %266 = vmatpush1.msra.mxu0 %v250
        %267 = vmatprep.subr.mxu0 0.0
        %268 = vmatpush1.msra.mxu0 %v251
        %269 = vmatprep.subr.mxu0 0.0
        %270 = vmatpush1.msra.mxu0 %v252
        %271 = vmatprep.subr.mxu0 0.0
        %272 = vmatpush1.msra.mxu0 %v253
        %273 = vmatprep.subr.mxu0 0.0
        %274 = vmatpush1.msra.mxu0 %v254
        %275 = vmatprep.subr.mxu0 0.0
        %276 = vmatpush1.msra.mxu0 0.0
        %277 = vmatprep.subr.mxu0 0.0
        %278 = vmatpush1.msra.mxu0 0.0
        %279 = vmatprep.subr.mxu0 0.0
        %280 = vmatpush1.msra.mxu0 0.0
        %281 = vmatprep.subr.mxu0 0.0
        %282 = vmatpush1.msra.mxu0 0.0
        %283 = vmatprep.subr.mxu0 0.0
        %284 = vmatpush1.msra.mxu0 0.0
        %285 = vmatprep.subr.mxu0 0.0
        %286 = vmatpush1.msra.mxu0 0.0
        %287 = vmatprep.subr.mxu0 0.0
        %288 = vmatpush1.msra.mxu0 0.0
        %289 = vmatprep.subr.mxu0 0.0
        %290 = vmatpush1.msra.mxu0 0.0
        %291 = vmatprep.subr.mxu0 0.0
        %292 = vmatpush1.msra.mxu0 0.0
        %293 = vmatprep.subr.mxu0 0.0
        %294 = vmatpush1.msra.mxu0 0.0
        %295 = vmatprep.subr.mxu0 0.0
        %296 = vmatpush1.msra.mxu0 0.0
        %297 = vmatprep.subr.mxu0 0.0
        %298 = vmatpush1.msra.mxu0 0.0
        %299 = vmatprep.subr.mxu0 0.0
        %300 = vmatpush1.msra.mxu0 0.0
        %301 = vmatprep.subr.mxu0 0.0
        %302 = vmatpush1.msra.mxu0 0.0
        %303 = vmatprep.subr.mxu0 0.0
        %304 = vmatpush1.msra.mxu0 0.0
        %305 = vmatprep.subr.mxu0 0.0
        %306 = vmatpush1.msra.mxu0 0.0
        %307 = vmatprep.subr.mxu0 0.0
        %308 = vmatpush1.msra.mxu0 0.0
        %309 = vmatprep.subr.mxu0 0.0
        %310 = vmatpush1.msra.mxu0 0.0
        %311 = vmatprep.subr.mxu0 0.0
        %312 = vmatpush1.msra.mxu0 0.0
        %313 = vmatprep.subr.mxu0 0.0
        %314 = vmatpush1.msra.mxu0 0.0
        %315 = vmatprep.subr.mxu0 0.0
        %316 = vmatpush1.msra.mxu0 0.0
        %317 = vmatprep.subr.mxu0 0.0
        %318 = vmatpush1.msra.mxu0 0.0
        %319 = vmatprep.subr.mxu0 0.0
        %320 = vmatpush1.msra.mxu0 0.0
        %321 = vmatprep.subr.mxu0 0.0
        %322 = vmatpush1.msra.mxu0 0.0
        %323 = vmatprep.mubr.f32.mxu0 0.0
        %324 = vmatmul.mubr.f32.gmra.mrb[0].mxu0 %v257
        %v325 = vpop.f32.mrb[0].mxu0
        %v326 = vadd.f32 0.0, %v325
        %v327 = vpop.f32.mrb[0].mxu0
        %328 = vdwg.mxu0
        %v329 = vadd.f32 %v246, %v326
        %vm330 = vcmask 261120
        %331 = vst.msk [vmem:[%s217] sm:$0xff] %vm330, %v329
        // Predicated region
        $region41: #{tpu_custom_call.1} parent=35 // pred_check
          %p332 = pneg %p228
        $region42: #{tpu_custom_call.1} parent=35 // pred_check_branch
          %334 = sbr.rel (%p332) target = $region44
        $region43: #{tpu_custom_call.1} parent=35 // pred_region
          %v335 = vld [vmem:[%s217] sm:$0xff]
          %v336 = vld [vmem:[%s3] sm:$0xff]
          %v337 = vadd.f32 %v335, %v336
          %338 = vst.msk [vmem:[%s217] sm:$0xff] %vm330, %v337
        $region44: #{tpu_custom_call.1} parent=35 // pred_fallthru
          _
        %s339 = sand.u32 %s133, 1
        %s340 = scalar_lea.sflag [#allocation4], %s339
        %s341 = sand.u32 %s133, 1
        %s342 = smul.addr %s341, 8
        %s343 = scalar_lea.vmem [#allocation3], %s342
        // Predicated region
        $region45: #{tpu_custom_call.1} parent=35 // pred_check
          %p344 = pneg %p143
        $region46: #{tpu_custom_call.1} parent=35 // pred_check_branch
          %346 = sbr.rel (%p344) target = $region48
        $region47: #{tpu_custom_call.1} parent=35 // pred_region
          %s348 = ssub.s32 128, 128
          %349 = vsyncadd %s340, %s348
          %s350 = smul.addr %s23, 128
          %s351 = scalar_lea.hbm %s4, %s350
          %s353 = sshll.u32 %s343, 4
          %s354 = int_to_ptr.vmem [resolvable:$true] %s353
          %356 = dma.vmem_to_hbm [thread:$0]  %s354, 128, %s351, %s340
        $region48: #{tpu_custom_call.1} parent=35 // pred_fallthru
          _
      $region36: #{tpu_custom_call.1} parent=5 // pred_fallthru
        _
      %p357 = scmp.le.s32.totalorder 2, %s14
      // Predicated region
      $region49: #{tpu_custom_call.1} parent=5 // pred_check
        %p358 = pneg %p357
      $region50: #{tpu_custom_call.1} parent=5 // pred_check_branch
        %360 = sbr.rel (%p358) target = $region52
      $region51: #{tpu_custom_call.1} parent=5 // pred_region
        %s361 = ssub.s32 %s14, 2
        // Predicated region
        $region53: #{tpu_custom_call.1} parent=51 // pred_check
          %p362 = pneg %p149
        $region54: #{tpu_custom_call.1} parent=51 // pred_check_branch
          %364 = sbr.rel (%p362) target = $region56
        $region55: #{tpu_custom_call.1} parent=51 // pred_region
          %s365 = sand.u32 %s134, 1
          %s366 = scalar_lea.sflag [#allocation4], %s365
          %s367 = sand.u32 %s134, 1
          %s368 = smul.addr %s367, 8
          %s369 = scalar_lea.vmem [#allocation3], %s368
          %370 = dma.done %s366, 128
        $region56: #{tpu_custom_call.1} parent=51 // pred_fallthru
          _
      $region52: #{tpu_custom_call.1} parent=5 // pred_fallthru
        _
    $region6: #{tpu_custom_call.1} parent=1 // loop_footer
      %s18 = sadd.s32 1, %s14
    $region7: #{tpu_custom_call.1} parent=1 // loop_footer_branch
      %13 = sbr.rel target = $region3
    $region8: #{tpu_custom_call.1} parent=1 // loop_exit
      _
    %371 = vsyncpa [#allocation4], 1
    %s372 = scalar_lea.sflag [#allocation4], 1
    %373 = vsyncpa %s372, 1

</llo_original>
